<compile_context>
chip_gen: v6e
topology: v6e:2x2x1
jax: 0.10.0
libtpu: 0.0.40
codegen_flags: <defaults>
</compile_context>

<pallas_src>
import functools
import math

import jax
import jax.numpy as jnp
from jax import lax
from jax.experimental import pallas as pl
from jax.experimental.pallas import tpu as pltpu


# ----------------------------------------------------------------------------
# helpers
# ----------------------------------------------------------------------------

def _round_up(x, m):
    return (x + m - 1) // m * m


def _pad_to(x, shape):
    pads = [(0, s - d) for d, s in zip(x.shape, shape)]
    if all(p == (0, 0) for p in pads):
        return x
    return jnp.pad(x, pads)


def _pick_tm(M, tm_max):
    """Row-tile: as big as allowed, but >=2 blocks when cheap (v7x megacore)."""
    Mr = _round_up(M, 8)
    tm = min(tm_max, Mr)
    if Mr // tm < 2 and Mr >= 16 and (Mr // 2) % 8 == 0:
        tm = Mr // 2
    return tm


# ----------------------------------------------------------------------------
# weight-resident row-streaming matmul + bias:   out = x @ W + b
# (W, b stay in VMEM across the whole grid; x / out stream in row tiles)
# ----------------------------------------------------------------------------

def _rowstream_matmul_kernel(x_ref, w_ref, b_ref, o_ref):
    y = jnp.dot(x_ref[...], w_ref[...], preferred_element_type=jnp.float32)
    o_ref[...] = (y + b_ref[...]).astype(o_ref.dtype)


def rowstream_matmul_bias(x, w, b, out_dtype=jnp.bfloat16, tm=512):
    """x: (M, K) bf16, w: (K, N) bf16, b: (N,) f32 -> (M, N) out_dtype."""
    M, K = x.shape
    K2, N = w.shape
    assert K == K2
    tm_eff = _pick_tm(M, tm)
    Mp = _round_up(M, tm_eff)
    x_p = x if Mp == M else _pad_to(x, (Mp, K))
    out = pl.pallas_call(
        _rowstream_matmul_kernel,
        out_shape=jax.ShapeDtypeStruct((Mp, N), out_dtype),
        grid=(Mp // tm_eff,),
        in_specs=[
            pl.BlockSpec((tm_eff, K), lambda i: (i, 0)),
            pl.BlockSpec((K, N), lambda i: (0, 0)),
            pl.BlockSpec((1, N), lambda i: (0, 0)),
        ],
        out_specs=pl.BlockSpec((tm_eff, N), lambda i: (i, 0)),
        compiler_params=pltpu.CompilerParams(
            dimension_semantics=("parallel",)),
    )(x_p.astype(jnp.bfloat16), w.astype(jnp.bfloat16),
      b.astype(jnp.float32).reshape(1, N))
    return out if Mp == M else out[:M]


# ----------------------------------------------------------------------------
# flash-style multi-head attention, heads on the grid, head_dim padded to 128
# ----------------------------------------------------------------------------

def _flash_mha_kernel(q_ref, k_ref, v_ref, bias_ref, o_ref,
                      m_ref, l_ref, acc_ref):
    ki = pl.program_id(2)

    @pl.when(ki == 0)
    def _init():
        m_ref[...] = jnp.full_like(m_ref, -1e30)
        l_ref[...] = jnp.zeros_like(l_ref)
        acc_ref[...] = jnp.zeros_like(acc_ref)

    q = q_ref[0]                       # (tq, dhp) bf16
    k = k_ref[0]                       # (tk, dhp) bf16
    v = v_ref[0]                       # (tk, dhp) bf16
    bias = bias_ref[0]                 # (1, tk)  f32 additive key-padding mask

    # scale is folded into Wq/bq at prepare_params() time.
    s = lax.dot_general(q, k, (((1,), (1,)), ((), ())),
                        preferred_element_type=jnp.float32)     # (tq, tk)
    s = s + bias

    m_prev = m_ref[...]                                         # (tq, 128)
    row_max = jnp.max(s, axis=-1, keepdims=True)                # (tq, 1)
    m_new = jnp.maximum(m_prev, row_max)                        # (tq, 128)
    m_col = m_new[:, 0:1]                                       # (tq, 1)
    alpha = jnp.exp(m_prev[:, 0:1] - m_col)                     # (tq, 1)
    p = jnp.exp(s - m_col)                                      # (tq, tk)

    l_ref[...] = alpha * l_ref[...] + jnp.sum(p, axis=-1, keepdims=True)
    acc_ref[...] = alpha * acc_ref[...] + lax.dot_general(
        p.astype(v.dtype), v, (((1,), (0,)), ((), ())),
        preferred_element_type=jnp.float32)
    m_ref[...] = m_new

    @pl.when(ki == pl.num_programs(2) - 1)
    def _finalize():
        inv_l = pl.reciprocal(l_ref[:, 0:1], approx=True)       # (tq, 1)
        o_ref[0] = (acc_ref[...] * inv_l).astype(o_ref.dtype)


def flash_mha(qkv, key_padding_mask, num_heads, dhp):
    """qkv: (N, Tp, 3*H*dhp) bf16 in per-head lane-padded layout.
    key_padding_mask: (N, Tp) bool (True = pad).  Returns (N, Tp, H*dhp) bf16.
    """
    N, Tp, three_hd = qkv.shape
    H = num_heads
    assert three_hd == 3 * H * dhp

    if Tp <= 512:
        tq = tk = Tp                      # single block per axis
    else:
        tq, tk = 512, 256                 # Tp is a multiple of 512 by layout

    bias = jnp.where(key_padding_mask, -1e9, 0.0).astype(jnp.float32)
    bias = bias[:, None, :]               # (N, 1, Tp)

    grid = (N * H, Tp // tq, Tp // tk)
    out = pl.pallas_call(
        _flash_mha_kernel,
        out_shape=jax.ShapeDtypeStruct((N, Tp, H * dhp), qkv.dtype),
        grid=grid,
        in_specs=[
            pl.BlockSpec((1, tq, dhp),
                         lambda bh, qi, ki: (bh // H, qi, bh % H)),
            pl.BlockSpec((1, tk, dhp),
                         lambda bh, qi, ki: (bh // H, ki, H + bh % H)),
            pl.BlockSpec((1, tk, dhp),
                         lambda bh, qi, ki: (bh // H, ki, 2 * H + bh % H)),
            pl.BlockSpec((1, 1, tk),
                         lambda bh, qi, ki: (bh // H, 0, ki)),
        ],
        out_specs=pl.BlockSpec((1, tq, dhp),
                               lambda bh, qi, ki: (bh // H, qi, bh % H)),
        scratch_shapes=[
            pltpu.VMEM((tq, 128), jnp.float32),   # running max (lane-dense)
            pltpu.VMEM((tq, 128), jnp.float32),   # running sum (lane-dense)
            pltpu.VMEM((tq, dhp), jnp.float32),   # running output acc
        ],
        compiler_params=pltpu.CompilerParams(
            dimension_semantics=("parallel", "parallel", "arbitrary")),
    )(qkv, qkv, qkv, bias)
    return out


# ----------------------------------------------------------------------------
# fused: LayerNorm(residual + x @ W + b)   (attention output projection)
# ----------------------------------------------------------------------------

def _proj_res_ln_kernel(x_ref, w_ref, b_ref, res_ref, g_ref, bb_ref, o_ref,
                        *, eps):
    y = jnp.dot(x_ref[...], w_ref[...], preferred_element_type=jnp.float32)
    y = y + b_ref[...] + res_ref[...].astype(jnp.float32)
    mean = jnp.mean(y, axis=-1, keepdims=True)
    var = jnp.mean(jnp.square(y - mean), axis=-1, keepdims=True)
    yn = (y - mean) * lax.rsqrt(var + eps)
    o_ref[...] = (yn * g_ref[...] + bb_ref[...]).astype(o_ref.dtype)


def proj_residual_layernorm(x, w, b, residual, gamma, beta, eps=1e-5,
                            tm=512, out_dtype=jnp.bfloat16):
    """x: (M, K) bf16, W: (K, C) resident; residual streams bf16."""
    M, K = x.shape
    _, C = w.shape
    tm_eff = _pick_tm(M, tm)
    Mp = _round_up(M, tm_eff)
    x_p = x if Mp == M else _pad_to(x, (Mp, K))
    r_p = residual if Mp == M else _pad_to(residual, (Mp, C))
    out = pl.pallas_call(
        functools.partial(_proj_res_ln_kernel, eps=eps),
        out_shape=jax.ShapeDtypeStruct((Mp, C), out_dtype),
        grid=(Mp // tm_eff,),
        in_specs=[
            pl.BlockSpec((tm_eff, K), lambda i: (i, 0)),
            pl.BlockSpec((K, C), lambda i: (0, 0)),
            pl.BlockSpec((1, C), lambda i: (0, 0)),
            pl.BlockSpec((tm_eff, C), lambda i: (i, 0)),
            pl.BlockSpec((1, C), lambda i: (0, 0)),
            pl.BlockSpec((1, C), lambda i: (0, 0)),
        ],
        out_specs=pl.BlockSpec((tm_eff, C), lambda i: (i, 0)),
        compiler_params=pltpu.CompilerParams(
            dimension_semantics=("parallel",)),
    )(x_p, w, b.astype(jnp.float32).reshape(1, C), r_p,
      gamma.astype(jnp.float32).reshape(1, C),
      beta.astype(jnp.float32).reshape(1, C))
    return out if Mp == M else out[:M]


# ----------------------------------------------------------------------------
# fused: LayerNorm(y + relu(y @ W1 + b1) @ W2 + b2)   (FFN block)
# ----------------------------------------------------------------------------

def _ffn_res_ln_kernel(y_ref, w1_ref, b1_ref, w2_ref, b2_ref, g_ref, bb_ref,
                       o_ref, *, eps):
    y_bf = y_ref[...]                                      # (tm, C) bf16
    h = jnp.dot(y_bf, w1_ref[...],
                preferred_element_type=jnp.float32) + b1_ref[...]
    h = jnp.maximum(h, 0.0)
    z = jnp.dot(h.astype(w2_ref.dtype), w2_ref[...],
                preferred_element_type=jnp.float32)
    z = z + b2_ref[...] + y_bf.astype(jnp.float32)
    mean = jnp.mean(z, axis=-1, keepdims=True)
    var = jnp.mean(jnp.square(z - mean), axis=-1, keepdims=True)
    zn = (z - mean) * lax.rsqrt(var + eps)
    o_ref[...] = (zn * g_ref[...] + bb_ref[...]).astype(o_ref.dtype)


def ffn_residual_layernorm(y, w1, b1, w2, b2, gamma, beta, eps=1e-5,
                           tm=512, out_dtype=jnp.float32):
    """W1/W2 resident; y streams bf16; (tm, F) intermediate stays in VMEM."""
    M, C = y.shape
    F = w1.shape[1]
    tm_eff = _pick_tm(M, tm)
    Mp = _round_up(M, tm_eff)
    y_p = y if Mp == M else _pad_to(y, (Mp, C))
    out = pl.pallas_call(
        functools.partial(_ffn_res_ln_kernel, eps=eps),
        out_shape=jax.ShapeDtypeStruct((Mp, C), out_dtype),
        grid=(Mp // tm_eff,),
        in_specs=[
            pl.BlockSpec((tm_eff, C), lambda i: (i, 0)),
            pl.BlockSpec((C, F), lambda i: (0, 0)),
            pl.BlockSpec((1, F), lambda i: (0, 0)),
            pl.BlockSpec((F, C), lambda i: (0, 0)),
            pl.BlockSpec((1, C), lambda i: (0, 0)),
            pl.BlockSpec((1, C), lambda i: (0, 0)),
            pl.BlockSpec((1, C), lambda i: (0, 0)),
        ],
        out_specs=pl.BlockSpec((tm_eff, C), lambda i: (i, 0)),
        compiler_params=pltpu.CompilerParams(
            dimension_semantics=("parallel",)),
    )(y_p, w1, b1.astype(jnp.float32).reshape(1, F), w2,
      b2.astype(jnp.float32).reshape(1, C),
      gamma.astype(jnp.float32).reshape(1, C),
      beta.astype(jnp.float32).reshape(1, C))
    return out if Mp == M else out[:M]


# ----------------------------------------------------------------------------
# plain-JAX glue (mask / length arithmetic / subsampling convs)
# ----------------------------------------------------------------------------

def make_pad_mask(lengths, max_len):
    """True at padded positions (static max_len)."""
    seq_range = jnp.arange(max_len)
    return seq_range[None, :] >= lengths[:, None]


def _conv3x3_s2_relu(x, w, b):
    # TODO(synk): tiny subsampling conv stays on XLA's native conv lowering —
    # a Pallas im2col matmul with K=Cin*9 would leave the MXU ~95% idle.
    y = lax.conv_general_dilated(x, w, window_strides=(2, 2), padding="VALID",
                                 dimension_numbers=("NCHW", "OIHW", "NCHW"))
    return jnp.maximum(y + b[None, :, None, None], 0.0)


# ----------------------------------------------------------------------------
# encoder_embed  (Conv2dSubsampling-style: 2x (3x3, stride 2) conv + linear)
# ----------------------------------------------------------------------------

def encoder_embed(p, features, feature_lengths):
    """features: (N, T, C) -> (x (N, Tp, d_model) bf16, x_lens, valid T)."""
    x = features[:, None, :, :]                               # (N, 1, T, C)
    x = _conv3x3_s2_relu(x, p["conv1_w"], p["conv1_b"])
    x = _conv3x3_s2_relu(x, p["conv2_w"], p["conv2_b"])
    N, C2, T1, F1 = x.shape
    x = x.transpose(0, 2, 1, 3).reshape(N, T1, C2 * F1)

    # pad time once to an attention-friendly length; carried to the very end.
    Tp = _round_up(T1, 8) if T1 <= 512 else _round_up(T1, 512)
    x = _pad_to(x, (N, Tp, C2 * F1)).astype(jnp.bfloat16)

    x2d = rowstream_matmul_bias(x.reshape(N * Tp, C2 * F1),
                                p["out_w_bf"], p["out_b"],
                                out_dtype=jnp.bfloat16)       # (N*Tp, d)
    d_model = p["out_w_bf"].shape[1]
    x = x2d.reshape(N, Tp, d_model)
    x_lens = ((feature_lengths - 1) // 2 - 1) // 2
    return x, x_lens, T1


# ----------------------------------------------------------------------------
# encoder  (one post-norm transformer encoder layer, PyTorch-style semantics)
# ----------------------------------------------------------------------------

def encoder(p, x_ntc, x_lens, src_key_padding_mask):
    """x_ntc: (N, Tp, C) bf16 -> (N, Tp, C) f32, lengths unchanged."""
    N, Tp, C = x_ntc.shape
    H = p["num_heads"]
    dhp = p["dhp"]
    x2d = x_ntc.reshape(N * Tp, C)

    # fused Q/K/V projection into the per-head lane-padded layout
    qkv = rowstream_matmul_bias(x2d, p["w_qkv"], p["b_qkv"],
                                out_dtype=jnp.bfloat16)       # (N*Tp, 3*H*dhp)
    qkv = qkv.reshape(N, Tp, 3 * H * dhp)

    attn = flash_mha(qkv, src_key_padding_mask, H, dhp)       # (N, Tp, H*dhp)
    attn2d = attn.reshape(N * Tp, H * dhp)

    # out-projection + bias + residual + LayerNorm fused in one kernel
    y = proj_residual_layernorm(attn2d, p["wo_pad"], p["bo"], x2d,
                                p["ln1_g"], p["ln1_b"])
    # FFN + residual + LayerNorm fused in one kernel (final output in f32)
    out = ffn_residual_layernorm(y, p["ff_w1_bf"], p["ff_b1"],
                                 p["ff_w2_bf"], p["ff_b2"],
                                 p["ln2_g"], p["ln2_b"])
    return out.reshape(N, Tp, C), x_lens


# ----------------------------------------------------------------------------
# EncoderModel.forward
# ----------------------------------------------------------------------------

def encoder_model_forward(params, features, feature_lengths):
    x, x_lens, T_valid = encoder_embed(params["embed"], features,
                                       feature_lengths)
    Tp = x.shape[1]
    src_key_padding_mask = make_pad_mask(x_lens, Tp)
    # The torch wrapper permutes (N,T,C)->(T,N,C) for the encoder and back;
    # this encoder computes natively in (N,T,C), so the two permutes cancel.
    encoder_out, encoder_out_lens = encoder(
        params["encoder"], x, x_lens, src_key_padding_mask)
    return encoder_out[:, :T_valid, :], encoder_out_lens


# ----------------------------------------------------------------------------
# Parameter init + one-time prep (weight fusion / head padding / bf16 casts)
# ----------------------------------------------------------------------------

def init_params(key, feat_dim, d_model, num_heads, dim_ff, c1=8, c2=8):
    ks = jax.random.split(key, 16)

    def w(k, shape, fan_in):
        return jax.random.normal(k, shape, jnp.float32) / math.sqrt(fan_in)

    embed = dict(
        conv1_w=w(ks[0], (c1, 1, 3, 3), 9),
        conv1_b=jnp.zeros((c1,), jnp.float32),
        conv2_w=w(ks[1], (c2, c1, 3, 3), c1 * 9),
        conv2_b=jnp.zeros((c2,), jnp.float32),
    )
    fp = (((feat_dim - 1) // 2) - 1) // 2          # freq bins after two convs
    embed["out_w"] = w(ks[2], (c2 * fp, d_model), c2 * fp)
    embed["out_b"] = jnp.zeros((d_model,), jnp.float32)

    enc = dict(
        num_heads=num_heads,
        wq=w(ks[3], (d_model, d_model), d_model),
        bq=jnp.zeros((d_model,), jnp.float32),
        wk=w(ks[4], (d_model, d_model), d_model),
        bk=jnp.zeros((d_model,), jnp.float32),
        wv=w(ks[5], (d_model, d_model), d_model),
        bv=jnp.zeros((d_model,), jnp.float32),
        wo=w(ks[6], (d_model, d_model), d_model),
        bo=jnp.zeros((d_model,), jnp.float32),
        ln1_g=jnp.ones((d_model,), jnp.float32),
        ln1_b=jnp.zeros((d_model,), jnp.float32),
        ff_w1=w(ks[7], (d_model, dim_ff), d_model),
        ff_b1=jnp.zeros((dim_ff,), jnp.float32),
        ff_w2=w(ks[8], (dim_ff, d_model), dim_ff),
        ff_b2=jnp.zeros((d_model,), jnp.float32),
        ln2_g=jnp.ones((d_model,), jnp.float32),
        ln2_b=jnp.zeros((d_model,), jnp.float32),
    )
    return dict(embed=embed, encoder=enc)


def prepare_params(params):
    """One-time derivation: fused+head-padded QKV / out-proj weights, bf16 casts,
    1/sqrt(dh) scale folded into Wq/bq (done once, NOT per forward)."""
    emb = dict(params["embed"])
    enc = dict(params["encoder"])
    C = enc["wq"].shape[0]
    H = enc["num_heads"]
    dh = C // H
    dhp = max(128, _round_up(dh, 128))
    scale = 1.0 / math.sqrt(dh)

    def head_pad_cols(wm, bv):           # (C, C) -> (C, H*dhp); (C,) -> (H*dhp,)
        w3 = jnp.pad(wm.reshape(C, H, dh), ((0, 0), (0, 0), (0, dhp - dh)))
        b2 = jnp.pad(bv.reshape(H, dh), ((0, 0), (0, dhp - dh)))
        return w3.reshape(C, H * dhp), b2.reshape(H * dhp)

    wq, bq = head_pad_cols(enc["wq"] * scale, enc["bq"] * scale)
    wk, bk = head_pad_cols(enc["wk"], enc["bk"])
    wv, bv = head_pad_cols(enc["wv"], enc["bv"])
    enc["w_qkv"] = jnp.concatenate([wq, wk, wv], axis=1).astype(jnp.bfloat16)
    enc["b_qkv"] = jnp.concatenate([bq, bk, bv], axis=0).astype(jnp.float32)

    wo3 = jnp.pad(enc["wo"].reshape(H, dh, C), ((0, 0), (0, dhp - dh), (0, 0)))
    enc["wo_pad"] = wo3.reshape(H * dhp, C).astype(jnp.bfloat16)

    enc["ff_w1_bf"] = enc["ff_w1"].astype(jnp.bfloat16)
    enc["ff_w2_bf"] = enc["ff_w2"].astype(jnp.bfloat16)
    emb["out_w_bf"] = emb["out_w"].astype(jnp.bfloat16)
    enc["dhp"] = dhp
    return dict(embed=emb, encoder=enc)


if __name__ == "__main__":
    N, T, FEAT = 2, 20, 16
    D_MODEL, HEADS, DIM_FF = 32, 4, 64

    key = jax.random.PRNGKey(0)
    k_feat, k_params = jax.random.split(key)

    features = jax.random.normal(k_feat, (N, T, FEAT), jnp.float32)
    feature_lengths = jnp.array([20, 14], jnp.int32)

    params = prepare_params(init_params(k_params, FEAT, D_MODEL, HEADS, DIM_FF))

    encoder_out, encoder_out_lens = encoder_model_forward(
        params, features, feature_lengths)
    encoder_out = jax.block_until_ready(encoder_out)
    encoder_out_lens = jax.block_until_ready(encoder_out_lens)

    assert encoder_out.shape == (N, 4, D_MODEL), encoder_out.shape
    assert encoder_out_lens.shape == (N,), encoder_out_lens.shape
    assert bool(jnp.all(jnp.isfinite(encoder_out)))

    print("KERNEL_OK")
</pallas_src>

<mosaic_0001>
module attributes {stable_mosaic.version = 11 : i64} {
  func.func @_rowstream_matmul_kernel(%arg0: i32, %arg1: memref<8x24xbf16, #tpu.memory_space<vmem>>, %arg2: memref<24x32xbf16, #tpu.memory_space<vmem>>, %arg3: memref<1x32xf32, #tpu.memory_space<vmem>>, %arg4: memref<8x32xbf16, #tpu.memory_space<vmem>>) attributes {dimension_semantics = [#tpu.dimension_semantics<parallel>], iteration_bounds = array<i64: 2>, scalar_prefetch = 0 : i64, scratch_operands = 0 : i64, tpu.core_type = #tpu.core_type<tc>, window_params = [{transform_indices = @transform_0, window_bounds = array<i64: 8, 24>}, {pipeline_mode = #tpu.pipeline_mode<synchronous>, transform_indices = @transform_1, window_bounds = array<i64: 24, 32>}, {pipeline_mode = #tpu.pipeline_mode<synchronous>, transform_indices = @transform_2, window_bounds = array<i64: 1, 32>}, {transform_indices = @transform_3, window_bounds = array<i64: 8, 32>}]} {
    %c0 = arith.constant 0 : index
    %c0_0 = arith.constant 0 : index
    %0 = vector.load %arg1[%c0, %c0_0] : memref<8x24xbf16, #tpu.memory_space<vmem>>, vector<8x24xbf16>
    %c0_1 = arith.constant 0 : index
    %c0_2 = arith.constant 0 : index
    %1 = vector.load %arg2[%c0_1, %c0_2] : memref<24x32xbf16, #tpu.memory_space<vmem>>, vector<24x32xbf16>
    %cst = arith.constant dense<0.000000e+00> : vector<8x32xf32>
    %2 = tpu.matmul %0, %1, %cst {dimension_numbers = #tpu.dot_dimension_numbers<[1], [0], [0], [1], [0, 0, 1, 1], [], []>} : vector<8x24xbf16>, vector<24x32xbf16>, vector<8x32xf32> -> vector<8x32xf32>
    %c0_3 = arith.constant 0 : index
    %c0_4 = arith.constant 0 : index
    %3 = vector.load %arg3[%c0_3, %c0_4] : memref<1x32xf32, #tpu.memory_space<vmem>>, vector<1x32xf32>
    %4 = vector.broadcast %3 : vector<1x32xf32> to vector<8x32xf32>
    %5 = arith.addf %2, %4 : vector<8x32xf32>
    %6 = arith.truncf %5 : vector<8x32xf32> to vector<8x32xbf16>
    %c0_5 = arith.constant 0 : index
    %c0_6 = arith.constant 0 : index
    %7 = vector.load %arg4[%c0_5, %c0_6] : memref<8x32xbf16, #tpu.memory_space<vmem>>, vector<8x32xbf16>
    tpu.vector_store %arg4[%c0_5, %c0_6], %6 {strides = array<i32>} : memref<8x32xbf16, #tpu.memory_space<vmem>>, vector<8x32xbf16>,
    return
  }
  func.func @transform_0(%arg0: i32) -> (i32, i32) {
    %c0_i32 = arith.constant 0 : i32
    %c0_i32_0 = arith.constant 0 : i32
    return %arg0, %c0_i32 : i32, i32
  }
  func.func @transform_1(%arg0: i32) -> (i32, i32) {
    %c0_i32 = arith.constant 0 : i32
    %c0_i32_0 = arith.constant 0 : i32
    %c0_i32_1 = arith.constant 0 : i32
    return %c0_i32, %c0_i32_0 : i32, i32
  }
  func.func @transform_2(%arg0: i32) -> (i32, i32) {
    %c0_i32 = arith.constant 0 : i32
    %c0_i32_0 = arith.constant 0 : i32
    %c0_i32_1 = arith.constant 0 : i32
    return %c0_i32, %c0_i32_0 : i32, i32
  }
  func.func @transform_3(%arg0: i32) -> (i32, i32) {
    %c0_i32 = arith.constant 0 : i32
    %c0_i32_0 = arith.constant 0 : i32
    return %arg0, %c0_i32 : i32, i32
  }
}

</mosaic_0001>

<llo_original>
// kernel: tpu_custom_call.1
$region0: #{tpu_custom_call.1}
  #allocation0 [shape = 'u32[]', space=smem, size = 0x4, offset = 0x4, fixed_abs, tag = 'smem constant byte address 0x4 - core index']
  #allocation1 [shape = 'u32[144,128]{1,0:T(1,128)}', space=vmem, size = 0x12000, scoped, tag = 'internal scratch']
  %s0 = inlined_call_operand.hbm [shape: bf16[16,24], index: 0, kind: input, shape index: {}]
  %s1 = inlined_call_operand.hbm [shape: bf16[24,32], index: 1, kind: input, shape index: {}]
  %s2 = inlined_call_operand.vmem [shape: f32[1,32], index: 2, kind: input, shape index: {}]
  %s3 = inlined_call_operand.hbm [shape: bf16[16,32], index: 3, kind: output, shape index: {}]
  %s4 = sld [smem:[#allocation0]]
  $region53: #{tpu_custom_call.1} parent=0
    _
  %s6 = ssub.s32 1, %s4
  %s7 = scalar_select 0, %s6, %s4
  $region1: #{tpu_custom_call.1} parent=0
    #allocation2 [shape = 'u8[4096]{0}', space=vmem, size = 0x1000, scoped, tag = 'input window, operand 0']
    #allocation3 [shape = 's32[2]{0}', space=sflag, size = 0x8, scoped, tag = 'scoped memory for tpu_custom_call.1']
    #allocation4 [shape = 's32[2]{0}', space=sflag, size = 0x8, scoped, tag = 'scoped memory for tpu_custom_call.1']
    #allocation5 [shape = 'u8[6144]{0}', space=vmem, size = 0x1800, scoped, tag = 'input window, operand 1, single buffered']
    #allocation6 [shape = 's32[1]{0}', space=sflag, size = 0x4, scoped, tag = 'scoped memory for tpu_custom_call.1']
    #allocation7 [shape = 'u8[4096]{0}', space=vmem, size = 0x1000, scoped, tag = 'output window, operand 0']
    %8 = vsyncpa [#allocation3], 0
    %s9 = scalar_lea.sflag [#allocation3], 1
    %10 = vsyncpa %s9, 0
    %11 = vsyncpa [#allocation6], 0
    %12 = vsyncpa [#allocation4], 0
    %s13 = scalar_lea.sflag [#allocation4], 1
    %14 = vsyncpa %s13, 0
    loop: start=0, step=1, limit=4
    $region2: #{tpu_custom_call.1} parent=1 // loop_pre_header
      _
    $region3: #{tpu_custom_call.1} parent=1 // loop_header
      %s16 = sphi 0, %s20
      %p17 = scmp.ge.s32.totalorder %s16, 4
      %s26 = sphi 0, %s28
      %s29 = sphi 0, %s26
      %s30 = sphi 0, %s29
      %s46 = sphi 0, %s30
      %s50 = sphi 0, %s50
      %s52 = sphi 0, %s50
      %s53 = sphi 0, %s52
      %s67 = sphi 0, %s53
      %s71 = sphi 0, %s71
      %s73 = sphi 0, %s71
      %s74 = sphi 0, %s73
      %s88 = sphi 0, %s74
      %s94 = sphi 0, %s96
      %s97 = sphi 0, %s94
      %s98 = sphi 0, %s97
      %s114 = sphi 0, %s98
    $region4: #{tpu_custom_call.1} parent=1 // loop_header_branch
      %19 = sbr.rel (%p17) target = $region8
    $region5: #{tpu_custom_call.1} parent=1 // loop_body
      %s21 = ssub.s32 %s16, 1
      %s22 = ssub.s32 %s16, 2
      %s23 = sadd.s32 %s16, 1
      %s24 = ssub.s32 %s16, %s23
      %p25 = scmp.eq.s32.totalorder %s24, 0
      %s27 = sadd.s32 %s26, 1
      %s28 = scalar_select %p25, %s26, %s27
      %p31 = pneg %p25
      %p32 = scmp.eq.s32.totalorder %s16, 1
      %p33 = por %p31, %p32
      %p34 = scmp.ne.s32.totalorder %s26, %s29
      %p35 = scmp.eq.s32.totalorder %s16, 0
      %p36 = por %p34, %p35
      %p37 = scmp.ne.s32.totalorder %s26, %s29
      %p38 = scmp.eq.s32.totalorder %s21, 1
      %p39 = por %p37, %p38
      %p40 = scmp.ne.s32.totalorder %s29, %s30
      %p41 = scmp.eq.s32.totalorder %s21, 0
      %p42 = por %p40, %p41
      %p43 = scmp.ne.s32.totalorder %s29, %s30
      %p44 = scmp.eq.s32.totalorder %s22, 1
      %p45 = por %p43, %p44
      %p47 = scmp.ne.s32.totalorder %s30, %s46
      %p48 = scmp.eq.s32.totalorder %s22, 0
      %p49 = por %p47, %p48
      %s51 = sadd.s32 %s50, 1
      %p54 = scmp.eq.s32.totalorder %s16, 1
      %p55 = scmp.ne.s32.totalorder %s50, %s52
      %p56 = scmp.eq.s32.totalorder %s16, 0
      %p57 = por %p55, %p56
      %p58 = scmp.ne.s32.totalorder %s50, %s52
      %p59 = scmp.eq.s32.totalorder %s21, 1
      %p60 = por %p58, %p59
      %p61 = scmp.ne.s32.totalorder %s52, %s53
      %p62 = scmp.eq.s32.totalorder %s21, 0
      %p63 = por %p61, %p62
      %p64 = scmp.ne.s32.totalorder %s52, %s53
      %p65 = scmp.eq.s32.totalorder %s22, 1
      %p66 = por %p64, %p65
      %p68 = scmp.ne.s32.totalorder %s53, %s67
      %p69 = scmp.eq.s32.totalorder %s22, 0
      %p70 = por %p68, %p69
      %s72 = sadd.s32 %s71, 1
      %p75 = scmp.eq.s32.totalorder %s16, 1
      %p76 = scmp.ne.s32.totalorder %s71, %s73
      %p77 = scmp.eq.s32.totalorder %s16, 0
      %p78 = por %p76, %p77
      %p79 = scmp.ne.s32.totalorder %s71, %s73
      %p80 = scmp.eq.s32.totalorder %s21, 1
      %p81 = por %p79, %p80
      %p82 = scmp.ne.s32.totalorder %s73, %s74
      %p83 = scmp.eq.s32.totalorder %s21, 0
      %p84 = por %p82, %p83
      %p85 = scmp.ne.s32.totalorder %s73, %s74
      %p86 = scmp.eq.s32.totalorder %s22, 1
      %p87 = por %p85, %p86
      %p89 = scmp.ne.s32.totalorder %s74, %s88
      %p90 = scmp.eq.s32.totalorder %s22, 0
      %p91 = por %p89, %p90
      %s92 = ssub.s32 %s16, %s23
      %p93 = scmp.eq.s32.totalorder %s92, 0
      %s95 = sadd.s32 %s94, 1
      %s96 = scalar_select %p93, %s94, %s95
      %p99 = pneg %p93
      %p100 = scmp.eq.s32.totalorder %s16, 1
      %p101 = por %p99, %p100
      %p102 = scmp.ne.s32.totalorder %s94, %s97
      %p103 = scmp.eq.s32.totalorder %s16, 0
      %p104 = por %p102, %p103
      %p105 = scmp.ne.s32.totalorder %s94, %s97
      %p106 = scmp.eq.s32.totalorder %s21, 1
      %p107 = por %p105, %p106
      %p108 = scmp.ne.s32.totalorder %s97, %s98
      %p109 = scmp.eq.s32.totalorder %s21, 0
      %p110 = por %p108, %p109
      %p111 = scmp.ne.s32.totalorder %s97, %s98
      %p112 = scmp.eq.s32.totalorder %s22, 1
      %p113 = por %p111, %p112
      %p115 = scmp.ne.s32.totalorder %s98, %s114
      %p116 = scmp.eq.s32.totalorder %s22, 0
      %p117 = por %p115, %p116
      %p118 = scmp.le.s32.totalorder 1, %s16
      %p119 = scmp.lt.s32.totalorder %s16, 3
      %p120 = pnand %p118, %p119
      %p121 = pneg %p120
      // Predicated region
      $region9: #{tpu_custom_call.1} parent=5 // pred_check
        _
      $region10: #{tpu_custom_call.1} parent=5 // pred_check_branch
        %123 = sbr.rel (%p120) target = $region12
      $region11: #{tpu_custom_call.1} parent=5 // pred_region
        %s124 = ssub.s32 %s16, 1
        // Predicated region
        $region13: #{tpu_custom_call.1} parent=11 // pred_check
          %p125 = pneg %p63
        $region14: #{tpu_custom_call.1} parent=11 // pred_check_branch
          %127 = sbr.rel (%p125) target = $region16
        $region15: #{tpu_custom_call.1} parent=11 // pred_region
          %s129 = ssub.s32 192, 192
          %130 = vsyncadd [#allocation6], %s129
          %s131 = sshll.u32 [#allocation5], 4
          %s132 = int_to_ptr.vmem [resolvable:$true] %s131
          %137 = dma.hbm_to_vmem [thread:$0]  %s1, 192, %s132, [#allocation6], 64, 64, 4
        $region16: #{tpu_custom_call.1} parent=11 // pred_fallthru
          _
        // Predicated region
        $region17: #{tpu_custom_call.1} parent=11 // pred_check
          %p138 = pneg %p84
        $region18: #{tpu_custom_call.1} parent=11 // pred_check_branch
          %140 = sbr.rel (%p138) target = $region20
        $region19: #{tpu_custom_call.1} parent=11 // pred_region
          _
        $region20: #{tpu_custom_call.1} parent=11 // pred_fallthru
          _
      $region12: #{tpu_custom_call.1} parent=5 // pred_fallthru
        _
      %p141 = scmp.lt.s32.totalorder %s16, 2
      // Predicated region
      $region21: #{tpu_custom_call.1} parent=5 // pred_check
        %p142 = pneg %p141
      $region22: #{tpu_custom_call.1} parent=5 // pred_check_branch
        %144 = sbr.rel (%p142) target = $region24
      $region23: #{tpu_custom_call.1} parent=5 // pred_region
        // Predicated region
        $region25: #{tpu_custom_call.1} parent=23 // pred_check
          %p145 = pneg %p36
        $region26: #{tpu_custom_call.1} parent=23 // pred_check_branch
          %147 = sbr.rel (%p145) target = $region28
        $region27: #{tpu_custom_call.1} parent=23 // pred_region
          %s148 = sand.u32 %s26, 1
          %s149 = scalar_lea.sflag [#allocation3], %s148
          %s150 = sand.u32 %s26, 1
          %s151 = smul.addr %s150, 4
          %s152 = scalar_lea.vmem [#allocation2], %s151
          %s154 = ssub.s32 64, 64
          %155 = vsyncadd %s149, %s154
          %s156 = smul.addr %s16, 64
          %s157 = scalar_lea.hbm %s0, %s156
          %s159 = sshll.u32 %s152, 4
          %s160 = int_to_ptr.vmem [resolvable:$true] %s159
          %162 = dma.hbm_to_vmem [thread:$0]  %s157, 64, %s160, %s149
        $region28: #{tpu_custom_call.1} parent=23 // pred_fallthru
          _
      $region24: #{tpu_custom_call.1} parent=5 // pred_fallthru
        _
      %p163 = scmp.le.s32.totalorder 1, %s16
      %p164 = scmp.lt.s32.totalorder %s16, 3
      %p165 = pnand %p163, %p164
      %p166 = pneg %p165
      // Predicated region
      $region29: #{tpu_custom_call.1} parent=5 // pred_check
        _
      $region30: #{tpu_custom_call.1} parent=5 // pred_check_branch
        %168 = sbr.rel (%p165) target = $region32
      $region31: #{tpu_custom_call.1} parent=5 // pred_region
        %s169 = ssub.s32 %s16, 1
        %s170 = sand.u32 %s29, 1
        %s171 = scalar_lea.sflag [#allocation3], %s170
        %s172 = sand.u32 %s29, 1
        %s173 = smul.addr %s172, 4
        %s174 = scalar_lea.vmem [#allocation2], %s173
        // Predicated region
        $region33: #{tpu_custom_call.1} parent=31 // pred_check
          %p175 = pneg %p42
        $region34: #{tpu_custom_call.1} parent=31 // pred_check_branch
          %177 = sbr.rel (%p175) target = $region36
        $region35: #{tpu_custom_call.1} parent=31 // pred_region
          %178 = dma.done %s171, 64
        $region36: #{tpu_custom_call.1} parent=31 // pred_fallthru
          _
        // Predicated region
        $region37: #{tpu_custom_call.1} parent=31 // pred_check
          %p179 = pneg %p63
        $region38: #{tpu_custom_call.1} parent=31 // pred_check_branch
          %181 = sbr.rel (%p179) target = $region40
        $region39: #{tpu_custom_call.1} parent=31 // pred_region
          %182 = dma.done [#allocation6], 192
        $region40: #{tpu_custom_call.1} parent=31 // pred_fallthru
          _
        %s183 = sand.u32 %s29, 1
        %s184 = scalar_lea.sflag [#allocation3], %s183
        %s185 = sand.u32 %s29, 1
        %s186 = smul.addr %s185, 4
        %s187 = scalar_lea.vmem [#allocation2], %s186
        %p188 = pneg %p42
        %p189 = pneg %p39
        %p190 = pneg %p63
        %p191 = pneg %p60
        %p192 = pneg %p84
        %p193 = pneg %p81
        %p194 = pneg %p110
        %p195 = pneg %p107
        %s196 = sand.u32 %s97, 1
        %s197 = scalar_lea.sflag [#allocation4], %s196
        %s198 = sand.u32 %s97, 1
        %s199 = smul.addr %s198, 4
        %s200 = scalar_lea.vmem [#allocation7], %s199
        %v202 = vld [vmem:[%s174] sm:$0xf]
        %v203 = vld [vmem:[#allocation5] sm:$0xf]
        %v204 = vld [vmem:[#allocation5 + $0x4] sm:$0xf]
        %v205 = vld [vmem:[#allocation5 + $0x8] sm:$0xf]
        %v206 = vld [vmem:[%s2] sm:$0x1]
        %v208 = vlaneseq
        %v209 = vshrl.u32 %v208, 7
        %v210 = vsub.s32 0, %v209
        %v211 = vrot.slane %v206, %v210
        %v216 = vunpack.c.l.b16 %v203
        %v217 = vunpack.c.l.b16 %v204
        %v218 = vunpack.c.l.b16 %v205
        %v219 = vpack.c.b16 %v217, %v216
        %v220 = vpack.c.b16 %v218, %v218
        %vm222 = vcmask 195584
        %v224 = vsel %vm222, %v202, 0
        %vm226 = vcmask 1043456
        %v228 = vsel %vm226, %v220, 0
        %230 = vmatprep.subr.bf16.mxu0 0
        %231 = vmatpush1.bf16.msra.mxu0 0
        %232 = vmatprep.subr.bf16.mxu0 0
        %233 = vmatpush1.bf16.msra.mxu0 0
        %234 = vmatprep.subr.bf16.mxu0 0
        %235 = vmatpush1.bf16.msra.mxu0 0
        %236 = vmatprep.subr.bf16.mxu0 0
        %237 = vmatpush1.bf16.msra.mxu0 0
        %238 = vmatprep.subr.bf16.mxu0 0
        %239 = vmatpush1.bf16.msra.mxu0 0
        %240 = vmatprep.subr.bf16.mxu0 0
        %241 = vmatpush1.bf16.msra.mxu0 0
        %242 = vmatprep.subr.bf16.mxu0 0
        %243 = vmatpush1.bf16.msra.mxu0 %v228
        %244 = vmatprep.subr.bf16.mxu0 0
        %245 = vmatpush1.bf16.msra.mxu0 %v219
        %246 = vmatprep.subr.bf16.mxu0 0
        %247 = vmatpush2.bf16.msra.mxu0 0
        %248 = vmatprep.subr.bf16.mxu0 0
        %249 = vmatpush2.bf16.msra.mxu0 0
        %250 = vmatprep.subr.bf16.mxu0 0
        %251 = vmatpush2.bf16.msra.mxu0 0
        %252 = vmatprep.subr.bf16.mxu0 0
        %253 = vmatpush2.bf16.msra.mxu0 0
        %254 = vmatprep.subr.bf16.mxu0 0
        %255 = vmatpush2.bf16.msra.mxu0 0
        %256 = vmatprep.subr.bf16.mxu0 0
        %257 = vmatpush2.bf16.msra.mxu0 0
        %258 = vmatprep.subr.bf16.mxu0 0
        %259 = vmatpush2.bf16.msra.mxu0 0
        %260 = vmatprep.subr.bf16.mxu0 0
        %261 = vmatpush2.bf16.msra.mxu0 0
        %262 = vmatprep.mubr.bf16.mxu0 0
        %263 = vmatmul.mubr.bf16.gmra.mxu0 %v224
        %v264 = vpop.f32.mrf.mxu0
        %v265 = vadd.f32 %v211, %v264
        %v266 = vpop.f32.mrf.mxu0
        %v267 = vpop.f32.mrf.mxu0
        %v268 = vpop.f32.mrf.mxu0
        %269 = vdwg.mxu0
        %v270 = vpack.c.bf16 %v265, %v265
        %vm271 = vcmask 257024
        %272 = vst.msk [vmem:[%s200] sm:$0xf] %vm271, %v270
        %s273 = sand.u32 %s97, 1
        %s274 = scalar_lea.sflag [#allocation4], %s273
        %s275 = sand.u32 %s97, 1
        %s276 = smul.addr %s275, 4
        %s277 = scalar_lea.vmem [#allocation7], %s276
        // Predicated region
        $region41: #{tpu_custom_call.1} parent=31 // pred_check
          %p278 = pneg %p107
        $region42: #{tpu_custom_call.1} parent=31 // pred_check_branch
          %280 = sbr.rel (%p278) target = $region44
        $region43: #{tpu_custom_call.1} parent=31 // pred_region
          %s282 = ssub.s32 64, 64
          %283 = vsyncadd %s274, %s282
          %s284 = smul.addr %s21, 64
          %s285 = scalar_lea.hbm %s3, %s284
          %s287 = sshll.u32 %s277, 4
          %s288 = int_to_ptr.vmem [resolvable:$true] %s287
          %290 = dma.vmem_to_hbm [thread:$0]  %s288, 64, %s285, %s274
        $region44: #{tpu_custom_call.1} parent=31 // pred_fallthru
          _
      $region32: #{tpu_custom_call.1} parent=5 // pred_fallthru
        _
      %p291 = scmp.le.s32.totalorder 2, %s16
      // Predicated region
      $region45: #{tpu_custom_call.1} parent=5 // pred_check
        %p292 = pneg %p291
      $region46: #{tpu_custom_call.1} parent=5 // pred_check_branch
        %294 = sbr.rel (%p292) target = $region48
      $region47: #{tpu_custom_call.1} parent=5 // pred_region
        %s295 = ssub.s32 %s16, 2
        // Predicated region
        $region49: #{tpu_custom_call.1} parent=47 // pred_check
          %p296 = pneg %p113
        $region50: #{tpu_custom_call.1} parent=47 // pred_check_branch
          %298 = sbr.rel (%p296) target = $region52
        $region51: #{tpu_custom_call.1} parent=47 // pred_region
          %s299 = sand.u32 %s98, 1
          %s300 = scalar_lea.sflag [#allocation4], %s299
          %s301 = sand.u32 %s98, 1
          %s302 = smul.addr %s301, 4
          %s303 = scalar_lea.vmem [#allocation7], %s302
          %304 = dma.done %s300, 64
        $region52: #{tpu_custom_call.1} parent=47 // pred_fallthru
          _
      $region48: #{tpu_custom_call.1} parent=5 // pred_fallthru
        _
    $region6: #{tpu_custom_call.1} parent=1 // loop_footer
      %s20 = sadd.s32 1, %s16
    $region7: #{tpu_custom_call.1} parent=1 // loop_footer_branch
      %15 = sbr.rel target = $region3
    $region8: #{tpu_custom_call.1} parent=1 // loop_exit
      _
    %305 = vsyncpa [#allocation3], 1
    %s306 = scalar_lea.sflag [#allocation3], 1
    %307 = vsyncpa %s306, 1
    %308 = vsyncpa [#allocation6], 1
    %309 = vsyncpa [#allocation4], 1
    %s310 = scalar_lea.sflag [#allocation4], 1
    %311 = vsyncpa %s310, 1

</llo_original>
